<compile_context>
chip_gen: v5e
topology: v5e:2x2
jax: 0.10.0
libtpu: 0.0.40
codegen_flags: <defaults>
</compile_context>

<pallas_src>
from functools import partial

import numpy as np
import jax
import jax.numpy as jnp
from jax.experimental import pallas as pl
from jax.experimental.pallas import tpu as pltpu


# Max lanes per tile: 128K lanes * 3 sublanes * 4 B ~= 1.5 MiB per f32 buffer
# -> ~7 MiB with double-buffered in+out+bits; fits every generation's scoped
# VMEM default while keeping per-step overhead negligible.
_MAX_LANE_TILE = 128 * 1024


def _round_up(n: int, m: int) -> int:
    return ((n + m - 1) // m) * m


def _vector_dropout_kernel(bits_ref, x_ref, o_ref, *, thr, inv_keep):
    # bits_ref: (1, T) uint32, one draw per vector; x_ref / o_ref: (D, T).
    keep = bits_ref[...] < jnp.uint32(thr)                              # (1, T)
    # Fold the 1/keep_prob rescale into the per-vector scale (f32, cast once at
    # the final store so low-precision dtypes are rounded exactly once).
    scale = jnp.where(keep, jnp.float32(inv_keep), jnp.float32(0.0))    # (1, T)
    o_ref[...] = (x_ref[...].astype(jnp.float32) * scale).astype(o_ref.dtype)


def vector_dropout(x, key, drop_rate, training=True):
    """Pallas implementation of VectorDropout.forward.

    x        : (..., D) array; one dropout mask entry per element of x.shape[:-1]
    key      : jax.random.PRNGKey driving the Bernoulli draws
    drop_rate: float in [0, 1)
    training : if False, identity (matches nn.Module eval mode)
    """
    if not training or drop_rate == 0.0:
        return x
    assert 0.0 <= drop_rate < 1.0

    lead = x.shape[:-1]
    D = x.shape[-1]
    M = int(np.prod(lead)) if lead else 1
    keep_prob = float(1.0 - drop_rate)
    inv_keep = 1.0 / keep_prob
    # uint32 threshold: P(bits < thr) ~= keep_prob
    thr = min(int(round(keep_prob * 2.0 ** 32)), 2 ** 32 - 1)

    # Lane-dense slab (D, M_pad); last dim a multiple of the lane tile.
    lane_tile = min(_MAX_LANE_TILE, _round_up(M, 128))
    M_pad = _round_up(M, lane_tile)
    x2 = jnp.moveaxis(x, -1, 0).reshape(D, M)
    if M_pad != M:
        x2 = jnp.pad(x2, ((0, 0), (0, M_pad - M)))

    # One uint32 per vector, already in the lane-dense (1, M_pad) shape.
    bits = jax.random.bits(key, (1, M_pad), dtype=jnp.uint32)

    grid = (M_pad // lane_tile,)
    itemsize = jnp.dtype(x.dtype).itemsize
    out2 = pl.pallas_call(
        partial(_vector_dropout_kernel, thr=thr, inv_keep=inv_keep),
        out_shape=jax.ShapeDtypeStruct((D, M_pad), x.dtype),
        grid=grid,
        in_specs=[
            pl.BlockSpec((1, lane_tile), lambda i: (0, i)),   # per-vector bits
            pl.BlockSpec((D, lane_tile), lambda i: (0, i)),   # x slab
        ],
        out_specs=pl.BlockSpec((D, lane_tile), lambda i: (0, i)),
        compiler_params=pltpu.CompilerParams(
            dimension_semantics=("parallel",)),
        cost_estimate=pl.CostEstimate(
            flops=2 * D * M_pad,
            transcendentals=0,
            bytes_accessed=2 * D * M_pad * itemsize + 4 * M_pad),
    )(bits, x2)

    out2 = out2[:, :M]
    return jnp.moveaxis(out2.reshape((D,) + lead), 0, -1)


if __name__ == "__main__":
    key = jax.random.PRNGKey(0)
    kx, kmask = jax.random.split(key)
    # Vector-channel features: 32 nodes, 8 vector channels, 3-D vectors.
    N, V, D = 32, 8, 3
    x = jax.random.normal(kx, (N, V, D), dtype=jnp.float32)

    drop_rate = 0.25
    out = jax.block_until_ready(vector_dropout(x, kmask, drop_rate, training=True))
    assert out.shape == x.shape and out.dtype == x.dtype

    # Each vector is either exactly zeroed or scaled by 1/(1 - drop_rate).
    keep_prob = 1.0 - drop_rate
    scaled = x * (1.0 / keep_prob)
    per_vec_zero = jnp.all(out == 0.0, axis=-1)
    per_vec_keep = jnp.all(
        jnp.abs(out - scaled) <= 1e-5 * (1.0 + jnp.abs(scaled)), axis=-1)
    assert bool(jnp.all(per_vec_zero | per_vec_keep)), "mask not applied per-vector"

    # Keep fraction should be near keep_prob (256 vectors -> ~0.027 std).
    frac_kept = float(jnp.mean(per_vec_keep.astype(jnp.float32)))
    assert 0.5 < frac_kept < 0.95, f"suspicious keep fraction {frac_kept}"

    # Eval mode is identity.
    out_eval = vector_dropout(x, kmask, drop_rate, training=False)
    assert bool(jnp.all(out_eval == x))

    print("KERNEL_OK")
</pallas_src>

<mosaic_0001>
module attributes {stable_mosaic.version = 11 : i64} {
  func.func @_vector_dropout_kernel(%arg0: i32, %arg1: memref<1x256xi32, #tpu.memory_space<vmem>>, %arg2: memref<3x256xf32, #tpu.memory_space<vmem>>, %arg3: memref<3x256xf32, #tpu.memory_space<vmem>>) attributes {dimension_semantics = [#tpu.dimension_semantics<parallel>], iteration_bounds = array<i64: 1>, scalar_prefetch = 0 : i64, scratch_operands = 0 : i64, tpu.core_type = #tpu.core_type<tc>, window_params = [{transform_indices = @transform_0, window_bounds = array<i64: 1, 256>}, {transform_indices = @transform_1, window_bounds = array<i64: 3, 256>}, {transform_indices = @transform_2, window_bounds = array<i64: 3, 256>}]} {
    %c0 = arith.constant 0 : index
    %c0_0 = arith.constant 0 : index
    %0 = vector.load %arg1[%c0, %c0_0] : memref<1x256xi32, #tpu.memory_space<vmem>>, vector<1x256xi32>
    %c-1073741824_i32 = arith.constant -1073741824 : i32
    %1 = vector.broadcast %c-1073741824_i32 : i32 to vector<1x256xi32>
    %2 = arith.cmpi ult, %0, %1 : vector<1x256xi32>
    %cst = arith.constant 1.33333337 : f32
    %cst_1 = arith.constant 0.000000e+00 : f32
    %3 = vector.broadcast %cst : f32 to vector<1x256xf32>
    %4 = vector.broadcast %cst_1 : f32 to vector<1x256xf32>
    %5 = arith.select %2, %3, %4 : vector<1x256xi1>, vector<1x256xf32>
    %c0_2 = arith.constant 0 : index
    %c0_3 = arith.constant 0 : index
    %6 = vector.load %arg2[%c0_2, %c0_3] : memref<3x256xf32, #tpu.memory_space<vmem>>, vector<3x256xf32>
    %7 = vector.broadcast %5 : vector<1x256xf32> to vector<3x256xf32>
    %8 = arith.mulf %6, %7 : vector<3x256xf32>
    %c0_4 = arith.constant 0 : index
    %c0_5 = arith.constant 0 : index
    %9 = vector.load %arg3[%c0_4, %c0_5] : memref<3x256xf32, #tpu.memory_space<vmem>>, vector<3x256xf32>
    tpu.vector_store %arg3[%c0_4, %c0_5], %8 {strides = array<i32>} : memref<3x256xf32, #tpu.memory_space<vmem>>, vector<3x256xf32>,
    return
  }
  func.func @transform_0(%arg0: i32) -> (i32, i32) {
    %c0_i32 = arith.constant 0 : i32
    %c0_i32_0 = arith.constant 0 : i32
    return %c0_i32, %arg0 : i32, i32
  }
  func.func @transform_1(%arg0: i32) -> (i32, i32) {
    %c0_i32 = arith.constant 0 : i32
    %c0_i32_0 = arith.constant 0 : i32
    return %c0_i32, %arg0 : i32, i32
  }
  func.func @transform_2(%arg0: i32) -> (i32, i32) {
    %c0_i32 = arith.constant 0 : i32
    %c0_i32_0 = arith.constant 0 : i32
    return %c0_i32, %arg0 : i32, i32
  }
}

</mosaic_0001>

<llo_original>
// kernel: tpu_custom_call.1
$region0: #{tpu_custom_call.1}
  #allocation0 [shape = 'u32[]', space=smem, size = 0x4, offset = 0x4, fixed_abs, tag = 'smem constant byte address 0x4 - core index']
  #allocation1 [shape = 'u32[72,128]{1,0:T(1,128)}', space=vmem, size = 0x9000, scoped, tag = 'internal scratch']
  %s0 = inlined_call_operand.hbm [shape: u32[1,256], index: 0, kind: input, shape index: {}]
  %s1 = inlined_call_operand.hbm [shape: f32[3,256], index: 1, kind: input, shape index: {}]
  %s2 = inlined_call_operand.hbm [shape: f32[3,256], index: 2, kind: output, shape index: {}]
  %s3 = sld [smem:[#allocation0]]
  $region26: #{tpu_custom_call.1} parent=0
    _
  %s5 = ssub.s32 1, %s3
  %s6 = scalar_select 0, %s5, %s3
  $region1: #{tpu_custom_call.1} parent=0
    #allocation2 [shape = 'u8[1024]{0}', space=vmem, size = 0x400, scoped, tag = 'input window, operand 0, single buffered']
    #allocation3 [shape = 's32[1]{0}', space=sflag, size = 0x4, scoped, tag = 'scoped memory for tpu_custom_call.1']
    #allocation4 [shape = 's32[1]{0}', space=sflag, size = 0x4, scoped, tag = 'scoped memory for tpu_custom_call.1']
    #allocation5 [shape = 'u8[4096]{0}', space=vmem, size = 0x1000, scoped, tag = 'input window, operand 1, single buffered']
    #allocation6 [shape = 's32[1]{0}', space=sflag, size = 0x4, scoped, tag = 'scoped memory for tpu_custom_call.1']
    #allocation7 [shape = 'u8[4096]{0}', space=vmem, size = 0x1000, scoped, tag = 'output window, operand 0, single buffered']
    %7 = vsyncpa [#allocation3], 0
    %8 = vsyncpa [#allocation6], 0
    %9 = vsyncpa [#allocation4], 0
    // Predicated region
    $region2: #{tpu_custom_call.1} parent=1 // pred_check
      _
    $region3: #{tpu_custom_call.1} parent=1 // pred_check_branch
      %11 = sbr.rel (0) target = $region5
    $region4: #{tpu_custom_call.1} parent=1 // pred_region
      %13 = vsyncadd [#allocation3], 0
      %s15 = sshll.u32 %s0, 4
      %s16 = int_to_ptr.hbm [resolvable:$true] %s15
      %s17 = sshll.u32 [#allocation2], 4
      %s18 = int_to_ptr.vmem [resolvable:$true] %s17
      %20 = dma.hbm_to_vmem [thread:$0]  %s16, 32, %s18, [#allocation3]
    $region5: #{tpu_custom_call.1} parent=1 // pred_fallthru
      _
    // Predicated region
    $region6: #{tpu_custom_call.1} parent=1 // pred_check
      _
    $region7: #{tpu_custom_call.1} parent=1 // pred_check_branch
      %22 = sbr.rel (0) target = $region9
    $region8: #{tpu_custom_call.1} parent=1 // pred_region
      %24 = vsyncadd [#allocation6], 0
      %s26 = sshll.u32 %s1, 4
      %s27 = int_to_ptr.hbm [resolvable:$true] %s26
      %s28 = sshll.u32 [#allocation5], 4
      %s29 = int_to_ptr.vmem [resolvable:$true] %s28
      %31 = dma.hbm_to_vmem [thread:$0]  %s27, 128, %s29, [#allocation6]
    $region9: #{tpu_custom_call.1} parent=1 // pred_fallthru
      _
    // Predicated region
    $region10: #{tpu_custom_call.1} parent=1 // pred_check
      _
    $region11: #{tpu_custom_call.1} parent=1 // pred_check_branch
      %33 = sbr.rel (0) target = $region13
    $region12: #{tpu_custom_call.1} parent=1 // pred_region
      %35 = dma.done [#allocation3], 32
    $region13: #{tpu_custom_call.1} parent=1 // pred_fallthru
      _
    // Predicated region
    $region14: #{tpu_custom_call.1} parent=1 // pred_check
      _
    $region15: #{tpu_custom_call.1} parent=1 // pred_check_branch
      %37 = sbr.rel (0) target = $region17
    $region16: #{tpu_custom_call.1} parent=1 // pred_region
      %39 = dma.done [#allocation6], 128
    $region17: #{tpu_custom_call.1} parent=1 // pred_fallthru
      _
    %v40 = vld [vmem:[#allocation2] sm:$0x3]
    %v41 = vadd.s32 %v40, 2147483648
    %vm43 = vcmp.lt.s32.totalorder %v41, 1073741824
    %v44 = vsel %vm43, 1.3333334, 0.0
    %v45 = vld [vmem:[#allocation5] sm:$0x77]
    %v47 = vperm.slane %v44, 0
    %v48 = vperm.slane %v44, 1
    %v49 = vrot.slane %v48, 4
    %vm50 = vcmask 1043456
    %v51 = vsel %vm50, %v47, %v49
    %v53 = vmul.f32 %v45, %v51
    %54 = vst [vmem:[#allocation7] sm:$0x77] %v53
    // Predicated region
    $region18: #{tpu_custom_call.1} parent=1 // pred_check
      _
    $region19: #{tpu_custom_call.1} parent=1 // pred_check_branch
      %56 = sbr.rel (0) target = $region21
    $region20: #{tpu_custom_call.1} parent=1 // pred_region
      %58 = vsyncadd [#allocation4], 0
      %s60 = sshll.u32 [#allocation7], 4
      %s61 = int_to_ptr.vmem [resolvable:$true] %s60
      %s62 = sshll.u32 %s2, 4
      %s63 = int_to_ptr.hbm [resolvable:$true] %s62
      %65 = dma.vmem_to_hbm [thread:$0]  %s61, 128, %s63, [#allocation4]
    $region21: #{tpu_custom_call.1} parent=1 // pred_fallthru
      _
    // Predicated region
    $region22: #{tpu_custom_call.1} parent=1 // pred_check
      _
    $region23: #{tpu_custom_call.1} parent=1 // pred_check_branch
      %67 = sbr.rel (0) target = $region25
    $region24: #{tpu_custom_call.1} parent=1 // pred_region
      %69 = dma.done [#allocation4], 128
    $region25: #{tpu_custom_call.1} parent=1 // pred_fallthru
      _
    %70 = vsyncpa [#allocation3], 1
    %71 = vsyncpa [#allocation6], 1
    %72 = vsyncpa [#allocation4], 1

</llo_original>
